<compile_context>
chip_gen: v5e
topology: v5e:2x2
jax: 0.10.0
libtpu: 0.0.40
codegen_flags: <defaults>
</compile_context>

<pallas_src>
import jax
import jax.numpy as jnp
from jax import lax
from jax.experimental import pallas as pl
from jax.experimental.pallas import tpu as pltpu

_FOLD = 16          # sublane fold: rows per logical channel (aligned for f32 & bf16 tiles)
_MAX_TILE_L = 2048  # max folded-lane tile (= 32K pixels per tile)
_LANE_CHUNK = 256   # inner compute chunk (bounds live vregs to ~20-24)


def _conv1x1_relu_kernel(w_ref, b_ref, x_ref, o_ref):
    """One (batch-block, lane-tile) grid step: 1x1 conv + bias + ReLU.

    w_ref: SMEM (C_out, C_in) f32 scalars
    b_ref: SMEM (C_out,)      f32 scalars
    x_ref: VMEM (BN, C_in*_FOLD,  TILE_L) activations (HW folded: sublanes x lanes)
    o_ref: VMEM (BN, C_out*_FOLD, TILE_L) output, same folding
    """
    bn, cin_f, tile_l = x_ref.shape
    c_in = cin_f // _FOLD
    c_out = o_ref.shape[1] // _FOLD

    if tile_l <= _LANE_CHUNK:
        lc = tile_l
    elif tile_l % _LANE_CHUNK == 0:
        lc = _LANE_CHUNK
    else:
        lc = 128
    n_chunks = tile_l // lc

    def compute_chunk(b, start):
        # Hoist the C_in input slabs for this lane chunk once (f32).
        xs = [x_ref[b, pl.ds(_FOLD * c, _FOLD), pl.ds(start, lc)].astype(jnp.float32)
              for c in range(c_in)]
        # Pure VPU path: C_out*C_in scalar*slab FMAs on dense (16, lc) slabs.
        # The MXU stays idle on purpose for such tiny channel counts.
        # TODO(synk): for real FFNet widths (>=64 channels) switch to an MXU
        # jnp.dot with channels zero-padded to the native MXU dim.
        # TODO(synk): on v6e/v7x a bf16 multiply with f32 accumulate would
        # roughly double VPU throughput; kept f32 here so the kernel is v5e-safe.
        for o in range(c_out):
            acc = xs[0] * w_ref[o, 0]
            for c in range(1, c_in):
                acc = acc + xs[c] * w_ref[o, c]
            acc = jnp.maximum(acc + b_ref[o], 0.0)
            o_ref[b, pl.ds(_FOLD * o, _FOLD), pl.ds(start, lc)] = acc.astype(o_ref.dtype)

    for b in range(bn):                       # BN is small & static
        if n_chunks == 1:
            compute_chunk(b, 0)
        else:
            def body(j, carry, b=b):
                compute_chunk(b, pl.multiple_of(j * lc, 128))
                return carry
            lax.fori_loop(0, n_chunks, body, 0)


def _pick_tile_l(l, max_tile=_MAX_TILE_L):
    """Largest multiple of 128 dividing l that is <= max_tile (l % 128 == 0)."""
    tile = min(l, max_tile)
    tile -= tile % 128
    while l % tile:
        tile -= 128
    return tile


def _pick_bn(n, per_sample_block_bytes, target=1 << 20, max_bytes=4 << 20):
    """Batch block size: ~1 MiB per grid step, keep batch grid axis >=2 / even (v7x)."""
    bn = 1
    for cand in range(1, n + 1):
        if n % cand:
            continue
        if cand * per_sample_block_bytes > max_bytes:
            break
        if n >= 2 and n // cand < 2:
            break                              # keep >=2 steps on the batch axis
        if n % 2 == 0 and (n // cand) % 2:
            continue                           # keep batch grid axis even
        bn = cand
        if cand * per_sample_block_bytes >= target:
            break
    return bn


def my_data_parallel_forward(x_nchw, weight, bias, *, device_ids=(0, 1), dim=0,
                             gather=True, out_dtype=jnp.bfloat16):
    """Pallas equivalent of MyDataParallel(conv1x1+ReLU module).forward(x).

    x_nchw : (N, C_in, H, W)
    weight : (C_out, C_in)   (1x1 conv weight, squeezed)
    bias   : (C_out,)
    """
    assert dim == 0, "scatter/gather dim 0 only (matches default)"
    n_dev = max(1, len(device_ids))
    N, C_in, H, W = x_nchw.shape
    C_out = weight.shape[0]
    # TODO(synk): PyTorch DataParallel tolerates uneven batch splits; here the
    # batch must divide evenly across device_ids.
    assert N % n_dev == 0, "batch must split evenly across devices"
    per_dev = N // n_dev
    HW = H * W

    # Fold HW across sublanes (x16) and lanes so every vreg is fully occupied.
    hw_pad = pl.cdiv(HW, _FOLD * 128) * (_FOLD * 128)
    x_flat = x_nchw.reshape(N, C_in, HW)
    if hw_pad != HW:
        # TODO(synk): for large ragged HW a masked-tail grid would avoid this
        # pad copy; padded pixels are sliced off below so their values are moot.
        x_flat = jnp.pad(x_flat, ((0, 0), (0, 0), (0, hw_pad - HW)))
    L = hw_pad // _FOLD
    x_fold = x_flat.reshape(N, C_in * _FOLD, L)      # free row-major view

    TILE_L = _pick_tile_l(L)
    per_sample_bytes = (C_in * _FOLD * TILE_L * x_fold.dtype.itemsize
                        + C_out * _FOLD * TILE_L * jnp.dtype(out_dtype).itemsize)
    BN = _pick_bn(N, per_sample_bytes)

    w_s = weight.astype(jnp.float32)      # (C_out, C_in) -> SMEM scalars
    b_s = bias.astype(jnp.float32)        # (C_out,)      -> SMEM scalars

    out = pl.pallas_call(
        _conv1x1_relu_kernel,
        out_shape=jax.ShapeDtypeStruct((N, C_out * _FOLD, L), out_dtype),
        grid_spec=pltpu.PrefetchScalarGridSpec(
            num_scalar_prefetch=0,
            grid=(N // BN, L // TILE_L),           # (device*batch blocks, lane tiles)
            in_specs=[
                pl.BlockSpec(memory_space=pltpu.MemorySpace.SMEM),    # weight
                pl.BlockSpec(memory_space=pltpu.MemorySpace.SMEM),    # bias
                pl.BlockSpec((BN, C_in * _FOLD, TILE_L),
                             lambda n, t: (n, 0, t)),                 # x
            ],
            out_specs=pl.BlockSpec((BN, C_out * _FOLD, TILE_L),
                                   lambda n, t: (n, 0, t)),
        ),
        compiler_params=pltpu.CompilerParams(
            dimension_semantics=("parallel", "parallel"),
            vmem_limit_bytes=32 * 1024 * 1024),
    )(w_s, b_s, x_fold)

    # Unfold (free view) -> drop HW padding -> NCHW.  The "gather" is free:
    # outputs are already contiguous along the batch dim.
    out_nchw = out.reshape(N, C_out, hw_pad)[:, :, :HW].reshape(N, C_out, H, W)
    if gather:
        return out_nchw
    # gather=False: list of per-device chunks (contiguous views, no copies).
    return [out_nchw[d * per_dev:(d + 1) * per_dev] for d in range(n_dev)]


if __name__ == "__main__":
    key = jax.random.PRNGKey(0)
    k1, k2, k3, k4 = jax.random.split(key, 4)

    C_in, C_out = 4, 8
    weight = jax.random.normal(k2, (C_out, C_in), dtype=jnp.float32) * 0.1
    bias = jax.random.normal(k3, (C_out,), dtype=jnp.float32) * 0.1

    def ref_module(x):
        # Wrapped module applied to the full batch == scatter->parallel_apply->gather.
        return jnp.maximum(
            jnp.einsum("nchw,oc->nohw", x, weight,
                       precision=lax.Precision.HIGHEST)
            + bias[None, :, None, None], 0.0)

    # --- small case (ragged HW -> padded path), bf16 output stream ---
    N, H, W = 2, 16, 16
    x = jax.random.normal(k1, (N, C_in, H, W), dtype=jnp.float32)
    y = my_data_parallel_forward(x, weight, bias, device_ids=(0, 1), gather=True)
    y = jax.block_until_ready(y)
    ref = ref_module(x)
    assert y.shape == (N, C_out, H, W) and y.dtype == jnp.bfloat16
    assert jnp.allclose(y.astype(jnp.float32), ref, atol=1e-2, rtol=1e-2)

    # Exact f32 output path.
    y32 = my_data_parallel_forward(x, weight, bias, device_ids=(0, 1),
                                   gather=True, out_dtype=jnp.float32)
    y32 = jax.block_until_ready(y32)
    assert jnp.allclose(y32, ref, atol=1e-5, rtol=1e-5)

    # gather=False path: list of per-device outputs (module semantics).
    y_parts = my_data_parallel_forward(x, weight, bias, device_ids=(0, 1),
                                       gather=False)
    assert len(y_parts) == 2
    assert jnp.allclose(jnp.concatenate(y_parts, axis=0).astype(jnp.float32),
                        ref, atol=1e-2, rtol=1e-2)

    # --- larger case: exercises batch blocking (BN=2), the chunked fori_loop
    #     compute path (TILE_L=1024 > 256), and the pad-free folded layout ---
    N2, H2, W2 = 4, 128, 128
    x2 = jax.random.normal(k4, (N2, C_in, H2, W2), dtype=jnp.float32)
    y2 = my_data_parallel_forward(x2, weight, bias, device_ids=(0, 1), gather=True)
    y2 = jax.block_until_ready(y2)
    ref2 = ref_module(x2)
    assert y2.shape == (N2, C_out, H2, W2)
    assert jnp.allclose(y2.astype(jnp.float32), ref2, atol=1e-2, rtol=1e-2)

    # TODO(synk): replicate()/parallel_apply() forward-hook semantics, uneven
    # batch splits, and _check_balance's CUDA device-property warnings have no
    # Pallas analogue beyond the batch-grid-axis modelling used here.
    print("KERNEL_OK")
</pallas_src>

<mosaic_0001>
module attributes {stable_mosaic.version = 11 : i64} {
  func.func @_conv1x1_relu_kernel(%arg0: i32, %arg1: i32, %arg2: memref<8x4xf32, #tpu.memory_space<smem>>, %arg3: memref<8xf32, #tpu.memory_space<smem>>, %arg4: memref<1x64x128xf32, #tpu.memory_space<vmem>>, %arg5: memref<1x128x128xbf16, #tpu.memory_space<vmem>>) attributes {dimension_semantics = [#tpu.dimension_semantics<parallel>, #tpu.dimension_semantics<parallel>], iteration_bounds = array<i64: 2, 1>, scalar_prefetch = 0 : i64, scratch_operands = 0 : i64, tpu.core_type = #tpu.core_type<tc>, window_params = [{transform_indices = @transform_0, window_bounds = array<i64: 8, 4>}, {transform_indices = @transform_1, window_bounds = array<i64: 8>}, {transform_indices = @transform_2, window_bounds = array<i64: 1, 64, 128>}, {transform_indices = @transform_3, window_bounds = array<i64: 1, 128, 128>}]} {
    %c0 = arith.constant 0 : index
    %c0_0 = arith.constant 0 : index
    %c0_1 = arith.constant 0 : index
    %0 = vector.load %arg4[%c0, %c0_0, %c0_1] : memref<1x64x128xf32, #tpu.memory_space<vmem>>, vector<1x16x128xf32>
    %1 = vector.shape_cast %0 : vector<1x16x128xf32> to vector<16x128xf32>
    %c0_2 = arith.constant 0 : index
    %c16 = arith.constant 16 : index
    %c0_3 = arith.constant 0 : index
    %2 = vector.load %arg4[%c0_2, %c16, %c0_3] : memref<1x64x128xf32, #tpu.memory_space<vmem>>, vector<1x16x128xf32>
    %3 = vector.shape_cast %2 : vector<1x16x128xf32> to vector<16x128xf32>
    %c0_4 = arith.constant 0 : index
    %c32 = arith.constant 32 : index
    %c0_5 = arith.constant 0 : index
    %4 = vector.load %arg4[%c0_4, %c32, %c0_5] : memref<1x64x128xf32, #tpu.memory_space<vmem>>, vector<1x16x128xf32>
    %5 = vector.shape_cast %4 : vector<1x16x128xf32> to vector<16x128xf32>
    %c0_6 = arith.constant 0 : index
    %c48 = arith.constant 48 : index
    %c0_7 = arith.constant 0 : index
    %6 = vector.load %arg4[%c0_6, %c48, %c0_7] : memref<1x64x128xf32, #tpu.memory_space<vmem>>, vector<1x16x128xf32>
    %7 = vector.shape_cast %6 : vector<1x16x128xf32> to vector<16x128xf32>
    %c0_8 = arith.constant 0 : index
    %c0_9 = arith.constant 0 : index
    %8 = memref.load %arg2[%c0_8, %c0_9] : memref<8x4xf32, #tpu.memory_space<smem>>
    %9 = vector.broadcast %8 : f32 to vector<16x128xf32>
    %10 = arith.mulf %1, %9 : vector<16x128xf32>
    %c0_10 = arith.constant 0 : index
    %c1 = arith.constant 1 : index
    %11 = memref.load %arg2[%c0_10, %c1] : memref<8x4xf32, #tpu.memory_space<smem>>
    %12 = vector.broadcast %11 : f32 to vector<16x128xf32>
    %13 = arith.mulf %3, %12 : vector<16x128xf32>
    %14 = arith.addf %10, %13 : vector<16x128xf32>
    %c0_11 = arith.constant 0 : index
    %c2 = arith.constant 2 : index
    %15 = memref.load %arg2[%c0_11, %c2] : memref<8x4xf32, #tpu.memory_space<smem>>
    %16 = vector.broadcast %15 : f32 to vector<16x128xf32>
    %17 = arith.mulf %5, %16 : vector<16x128xf32>
    %18 = arith.addf %14, %17 : vector<16x128xf32>
    %c0_12 = arith.constant 0 : index
    %c3 = arith.constant 3 : index
    %19 = memref.load %arg2[%c0_12, %c3] : memref<8x4xf32, #tpu.memory_space<smem>>
    %20 = vector.broadcast %19 : f32 to vector<16x128xf32>
    %21 = arith.mulf %7, %20 : vector<16x128xf32>
    %22 = arith.addf %18, %21 : vector<16x128xf32>
    %c0_13 = arith.constant 0 : index
    %23 = memref.load %arg3[%c0_13] : memref<8xf32, #tpu.memory_space<smem>>
    %24 = vector.broadcast %23 : f32 to vector<16x128xf32>
    %25 = arith.addf %22, %24 : vector<16x128xf32>
    %cst = arith.constant 0.000000e+00 : f32
    %26 = vector.broadcast %cst : f32 to vector<16x128xf32>
    %27 = arith.maximumf %25, %26 : vector<16x128xf32>
    %28 = arith.truncf %27 : vector<16x128xf32> to vector<16x128xbf16>
    %c0_14 = arith.constant 0 : index
    %c0_15 = arith.constant 0 : index
    %c0_16 = arith.constant 0 : index
    %29 = vector.load %arg5[%c0_14, %c0_15, %c0_16] : memref<1x128x128xbf16, #tpu.memory_space<vmem>>, vector<1x16x128xbf16>
    %30 = vector.shape_cast %29 : vector<1x16x128xbf16> to vector<16x128xbf16>
    %31 = vector.shape_cast %28 : vector<16x128xbf16> to vector<1x16x128xbf16>
    tpu.vector_store %arg5[%c0_14, %c0_15, %c0_16], %31 {strides = array<i32>} : memref<1x128x128xbf16, #tpu.memory_space<vmem>>, vector<1x16x128xbf16>,
    %c1_17 = arith.constant 1 : index
    %c0_18 = arith.constant 0 : index
    %32 = memref.load %arg2[%c1_17, %c0_18] : memref<8x4xf32, #tpu.memory_space<smem>>
    %33 = vector.broadcast %32 : f32 to vector<16x128xf32>
    %34 = arith.mulf %1, %33 : vector<16x128xf32>
    %c1_19 = arith.constant 1 : index
    %c1_20 = arith.constant 1 : index
    %35 = memref.load %arg2[%c1_19, %c1_20] : memref<8x4xf32, #tpu.memory_space<smem>>
    %36 = vector.broadcast %35 : f32 to vector<16x128xf32>
    %37 = arith.mulf %3, %36 : vector<16x128xf32>
    %38 = arith.addf %34, %37 : vector<16x128xf32>
    %c1_21 = arith.constant 1 : index
    %c2_22 = arith.constant 2 : index
    %39 = memref.load %arg2[%c1_21, %c2_22] : memref<8x4xf32, #tpu.memory_space<smem>>
    %40 = vector.broadcast %39 : f32 to vector<16x128xf32>
    %41 = arith.mulf %5, %40 : vector<16x128xf32>
    %42 = arith.addf %38, %41 : vector<16x128xf32>
    %c1_23 = arith.constant 1 : index
    %c3_24 = arith.constant 3 : index
    %43 = memref.load %arg2[%c1_23, %c3_24] : memref<8x4xf32, #tpu.memory_space<smem>>
    %44 = vector.broadcast %43 : f32 to vector<16x128xf32>
    %45 = arith.mulf %7, %44 : vector<16x128xf32>
    %46 = arith.addf %42, %45 : vector<16x128xf32>
    %c1_25 = arith.constant 1 : index
    %47 = memref.load %arg3[%c1_25] : memref<8xf32, #tpu.memory_space<smem>>
    %48 = vector.broadcast %47 : f32 to vector<16x128xf32>
    %49 = arith.addf %46, %48 : vector<16x128xf32>
    %cst_26 = arith.constant 0.000000e+00 : f32
    %50 = vector.broadcast %cst_26 : f32 to vector<16x128xf32>
    %51 = arith.maximumf %49, %50 : vector<16x128xf32>
    %52 = arith.truncf %51 : vector<16x128xf32> to vector<16x128xbf16>
    %c0_27 = arith.constant 0 : index
    %c16_28 = arith.constant 16 : index
    %c0_29 = arith.constant 0 : index
    %53 = vector.load %arg5[%c0_27, %c16_28, %c0_29] : memref<1x128x128xbf16, #tpu.memory_space<vmem>>, vector<1x16x128xbf16>
    %54 = vector.shape_cast %53 : vector<1x16x128xbf16> to vector<16x128xbf16>
    %55 = vector.shape_cast %52 : vector<16x128xbf16> to vector<1x16x128xbf16>
    tpu.vector_store %arg5[%c0_27, %c16_28, %c0_29], %55 {strides = array<i32>} : memref<1x128x128xbf16, #tpu.memory_space<vmem>>, vector<1x16x128xbf16>,
    %c2_30 = arith.constant 2 : index
    %c0_31 = arith.constant 0 : index
    %56 = memref.load %arg2[%c2_30, %c0_31] : memref<8x4xf32, #tpu.memory_space<smem>>
    %57 = vector.broadcast %56 : f32 to vector<16x128xf32>
    %58 = arith.mulf %1, %57 : vector<16x128xf32>
    %c2_32 = arith.constant 2 : index
    %c1_33 = arith.constant 1 : index
    %59 = memref.load %arg2[%c2_32, %c1_33] : memref<8x4xf32, #tpu.memory_space<smem>>
    %60 = vector.broadcast %59 : f32 to vector<16x128xf32>
    %61 = arith.mulf %3, %60 : vector<16x128xf32>
    %62 = arith.addf %58, %61 : vector<16x128xf32>
    %c2_34 = arith.constant 2 : index
    %c2_35 = arith.constant 2 : index
    %63 = memref.load %arg2[%c2_34, %c2_35] : memref<8x4xf32, #tpu.memory_space<smem>>
    %64 = vector.broadcast %63 : f32 to vector<16x128xf32>
    %65 = arith.mulf %5, %64 : vector<16x128xf32>
    %66 = arith.addf %62, %65 : vector<16x128xf32>
    %c2_36 = arith.constant 2 : index
    %c3_37 = arith.constant 3 : index
    %67 = memref.load %arg2[%c2_36, %c3_37] : memref<8x4xf32, #tpu.memory_space<smem>>
    %68 = vector.broadcast %67 : f32 to vector<16x128xf32>
    %69 = arith.mulf %7, %68 : vector<16x128xf32>
    %70 = arith.addf %66, %69 : vector<16x128xf32>
    %c2_38 = arith.constant 2 : index
    %71 = memref.load %arg3[%c2_38] : memref<8xf32, #tpu.memory_space<smem>>
    %72 = vector.broadcast %71 : f32 to vector<16x128xf32>
    %73 = arith.addf %70, %72 : vector<16x128xf32>
    %cst_39 = arith.constant 0.000000e+00 : f32
    %74 = vector.broadcast %cst_39 : f32 to vector<16x128xf32>
    %75 = arith.maximumf %73, %74 : vector<16x128xf32>
    %76 = arith.truncf %75 : vector<16x128xf32> to vector<16x128xbf16>
    %c0_40 = arith.constant 0 : index
    %c32_41 = arith.constant 32 : index
    %c0_42 = arith.constant 0 : index
    %77 = vector.load %arg5[%c0_40, %c32_41, %c0_42] : memref<1x128x128xbf16, #tpu.memory_space<vmem>>, vector<1x16x128xbf16>
    %78 = vector.shape_cast %77 : vector<1x16x128xbf16> to vector<16x128xbf16>
    %79 = vector.shape_cast %76 : vector<16x128xbf16> to vector<1x16x128xbf16>
    tpu.vector_store %arg5[%c0_40, %c32_41, %c0_42], %79 {strides = array<i32>} : memref<1x128x128xbf16, #tpu.memory_space<vmem>>, vector<1x16x128xbf16>,
    %c3_43 = arith.constant 3 : index
    %c0_44 = arith.constant 0 : index
    %80 = memref.load %arg2[%c3_43, %c0_44] : memref<8x4xf32, #tpu.memory_space<smem>>
    %81 = vector.broadcast %80 : f32 to vector<16x128xf32>
    %82 = arith.mulf %1, %81 : vector<16x128xf32>
    %c3_45 = arith.constant 3 : index
    %c1_46 = arith.constant 1 : index
    %83 = memref.load %arg2[%c3_45, %c1_46] : memref<8x4xf32, #tpu.memory_space<smem>>
    %84 = vector.broadcast %83 : f32 to vector<16x128xf32>
    %85 = arith.mulf %3, %84 : vector<16x128xf32>
    %86 = arith.addf %82, %85 : vector<16x128xf32>
    %c3_47 = arith.constant 3 : index
    %c2_48 = arith.constant 2 : index
    %87 = memref.load %arg2[%c3_47, %c2_48] : memref<8x4xf32, #tpu.memory_space<smem>>
    %88 = vector.broadcast %87 : f32 to vector<16x128xf32>
    %89 = arith.mulf %5, %88 : vector<16x128xf32>
    %90 = arith.addf %86, %89 : vector<16x128xf32>
    %c3_49 = arith.constant 3 : index
    %c3_50 = arith.constant 3 : index
    %91 = memref.load %arg2[%c3_49, %c3_50] : memref<8x4xf32, #tpu.memory_space<smem>>
    %92 = vector.broadcast %91 : f32 to vector<16x128xf32>
    %93 = arith.mulf %7, %92 : vector<16x128xf32>
    %94 = arith.addf %90, %93 : vector<16x128xf32>
    %c3_51 = arith.constant 3 : index
    %95 = memref.load %arg3[%c3_51] : memref<8xf32, #tpu.memory_space<smem>>
    %96 = vector.broadcast %95 : f32 to vector<16x128xf32>
    %97 = arith.addf %94, %96 : vector<16x128xf32>
    %cst_52 = arith.constant 0.000000e+00 : f32
    %98 = vector.broadcast %cst_52 : f32 to vector<16x128xf32>
    %99 = arith.maximumf %97, %98 : vector<16x128xf32>
    %100 = arith.truncf %99 : vector<16x128xf32> to vector<16x128xbf16>
    %c0_53 = arith.constant 0 : index
    %c48_54 = arith.constant 48 : index
    %c0_55 = arith.constant 0 : index
    %101 = vector.load %arg5[%c0_53, %c48_54, %c0_55] : memref<1x128x128xbf16, #tpu.memory_space<vmem>>, vector<1x16x128xbf16>
    %102 = vector.shape_cast %101 : vector<1x16x128xbf16> to vector<16x128xbf16>
    %103 = vector.shape_cast %100 : vector<16x128xbf16> to vector<1x16x128xbf16>
    tpu.vector_store %arg5[%c0_53, %c48_54, %c0_55], %103 {strides = array<i32>} : memref<1x128x128xbf16, #tpu.memory_space<vmem>>, vector<1x16x128xbf16>,
    %c4 = arith.constant 4 : index
    %c0_56 = arith.constant 0 : index
    %104 = memref.load %arg2[%c4, %c0_56] : memref<8x4xf32, #tpu.memory_space<smem>>
    %105 = vector.broadcast %104 : f32 to vector<16x128xf32>
    %106 = arith.mulf %1, %105 : vector<16x128xf32>
    %c4_57 = arith.constant 4 : index
    %c1_58 = arith.constant 1 : index
    %107 = memref.load %arg2[%c4_57, %c1_58] : memref<8x4xf32, #tpu.memory_space<smem>>
    %108 = vector.broadcast %107 : f32 to vector<16x128xf32>
    %109 = arith.mulf %3, %108 : vector<16x128xf32>
    %110 = arith.addf %106, %109 : vector<16x128xf32>
    %c4_59 = arith.constant 4 : index
    %c2_60 = arith.constant 2 : index
    %111 = memref.load %arg2[%c4_59, %c2_60] : memref<8x4xf32, #tpu.memory_space<smem>>
    %112 = vector.broadcast %111 : f32 to vector<16x128xf32>
    %113 = arith.mulf %5, %112 : vector<16x128xf32>
    %114 = arith.addf %110, %113 : vector<16x128xf32>
    %c4_61 = arith.constant 4 : index
    %c3_62 = arith.constant 3 : index
    %115 = memref.load %arg2[%c4_61, %c3_62] : memref<8x4xf32, #tpu.memory_space<smem>>
    %116 = vector.broadcast %115 : f32 to vector<16x128xf32>
    %117 = arith.mulf %7, %116 : vector<16x128xf32>
    %118 = arith.addf %114, %117 : vector<16x128xf32>
    %c4_63 = arith.constant 4 : index
    %119 = memref.load %arg3[%c4_63] : memref<8xf32, #tpu.memory_space<smem>>
    %120 = vector.broadcast %119 : f32 to vector<16x128xf32>
    %121 = arith.addf %118, %120 : vector<16x128xf32>
    %cst_64 = arith.constant 0.000000e+00 : f32
    %122 = vector.broadcast %cst_64 : f32 to vector<16x128xf32>
    %123 = arith.maximumf %121, %122 : vector<16x128xf32>
    %124 = arith.truncf %123 : vector<16x128xf32> to vector<16x128xbf16>
    %c0_65 = arith.constant 0 : index
    %c64 = arith.constant 64 : index
    %c0_66 = arith.constant 0 : index
    %125 = vector.load %arg5[%c0_65, %c64, %c0_66] : memref<1x128x128xbf16, #tpu.memory_space<vmem>>, vector<1x16x128xbf16>
    %126 = vector.shape_cast %125 : vector<1x16x128xbf16> to vector<16x128xbf16>
    %127 = vector.shape_cast %124 : vector<16x128xbf16> to vector<1x16x128xbf16>
    tpu.vector_store %arg5[%c0_65, %c64, %c0_66], %127 {strides = array<i32>} : memref<1x128x128xbf16, #tpu.memory_space<vmem>>, vector<1x16x128xbf16>,
    %c5 = arith.constant 5 : index
    %c0_67 = arith.constant 0 : index
    %128 = memref.load %arg2[%c5, %c0_67] : memref<8x4xf32, #tpu.memory_space<smem>>
    %129 = vector.broadcast %128 : f32 to vector<16x128xf32>
    %130 = arith.mulf %1, %129 : vector<16x128xf32>
    %c5_68 = arith.constant 5 : index
    %c1_69 = arith.constant 1 : index
    %131 = memref.load %arg2[%c5_68, %c1_69] : memref<8x4xf32, #tpu.memory_space<smem>>
    %132 = vector.broadcast %131 : f32 to vector<16x128xf32>
    %133 = arith.mulf %3, %132 : vector<16x128xf32>
    %134 = arith.addf %130, %133 : vector<16x128xf32>
    %c5_70 = arith.constant 5 : index
    %c2_71 = arith.constant 2 : index
    %135 = memref.load %arg2[%c5_70, %c2_71] : memref<8x4xf32, #tpu.memory_space<smem>>
    %136 = vector.broadcast %135 : f32 to vector<16x128xf32>
    %137 = arith.mulf %5, %136 : vector<16x128xf32>
    %138 = arith.addf %134, %137 : vector<16x128xf32>
    %c5_72 = arith.constant 5 : index
    %c3_73 = arith.constant 3 : index
    %139 = memref.load %arg2[%c5_72, %c3_73] : memref<8x4xf32, #tpu.memory_space<smem>>
    %140 = vector.broadcast %139 : f32 to vector<16x128xf32>
    %141 = arith.mulf %7, %140 : vector<16x128xf32>
    %142 = arith.addf %138, %141 : vector<16x128xf32>
    %c5_74 = arith.constant 5 : index
    %143 = memref.load %arg3[%c5_74] : memref<8xf32, #tpu.memory_space<smem>>
    %144 = vector.broadcast %143 : f32 to vector<16x128xf32>
    %145 = arith.addf %142, %144 : vector<16x128xf32>
    %cst_75 = arith.constant 0.000000e+00 : f32
    %146 = vector.broadcast %cst_75 : f32 to vector<16x128xf32>
    %147 = arith.maximumf %145, %146 : vector<16x128xf32>
    %148 = arith.truncf %147 : vector<16x128xf32> to vector<16x128xbf16>
    %c0_76 = arith.constant 0 : index
    %c80 = arith.constant 80 : index
    %c0_77 = arith.constant 0 : index
    %149 = vector.load %arg5[%c0_76, %c80, %c0_77] : memref<1x128x128xbf16, #tpu.memory_space<vmem>>, vector<1x16x128xbf16>
    %150 = vector.shape_cast %149 : vector<1x16x128xbf16> to vector<16x128xbf16>
    %151 = vector.shape_cast %148 : vector<16x128xbf16> to vector<1x16x128xbf16>
    tpu.vector_store %arg5[%c0_76, %c80, %c0_77], %151 {strides = array<i32>} : memref<1x128x128xbf16, #tpu.memory_space<vmem>>, vector<1x16x128xbf16>,
    %c6 = arith.constant 6 : index
    %c0_78 = arith.constant 0 : index
    %152 = memref.load %arg2[%c6, %c0_78] : memref<8x4xf32, #tpu.memory_space<smem>>
    %153 = vector.broadcast %152 : f32 to vector<16x128xf32>
    %154 = arith.mulf %1, %153 : vector<16x128xf32>
    %c6_79 = arith.constant 6 : index
    %c1_80 = arith.constant 1 : index
    %155 = memref.load %arg2[%c6_79, %c1_80] : memref<8x4xf32, #tpu.memory_space<smem>>
    %156 = vector.broadcast %155 : f32 to vector<16x128xf32>
    %157 = arith.mulf %3, %156 : vector<16x128xf32>
    %158 = arith.addf %154, %157 : vector<16x128xf32>
    %c6_81 = arith.constant 6 : index
    %c2_82 = arith.constant 2 : index
    %159 = memref.load %arg2[%c6_81, %c2_82] : memref<8x4xf32, #tpu.memory_space<smem>>
    %160 = vector.broadcast %159 : f32 to vector<16x128xf32>
    %161 = arith.mulf %5, %160 : vector<16x128xf32>
    %162 = arith.addf %158, %161 : vector<16x128xf32>
    %c6_83 = arith.constant 6 : index
    %c3_84 = arith.constant 3 : index
    %163 = memref.load %arg2[%c6_83, %c3_84] : memref<8x4xf32, #tpu.memory_space<smem>>
    %164 = vector.broadcast %163 : f32 to vector<16x128xf32>
    %165 = arith.mulf %7, %164 : vector<16x128xf32>
    %166 = arith.addf %162, %165 : vector<16x128xf32>
    %c6_85 = arith.constant 6 : index
    %167 = memref.load %arg3[%c6_85] : memref<8xf32, #tpu.memory_space<smem>>
    %168 = vector.broadcast %167 : f32 to vector<16x128xf32>
    %169 = arith.addf %166, %168 : vector<16x128xf32>
    %cst_86 = arith.constant 0.000000e+00 : f32
    %170 = vector.broadcast %cst_86 : f32 to vector<16x128xf32>
    %171 = arith.maximumf %169, %170 : vector<16x128xf32>
    %172 = arith.truncf %171 : vector<16x128xf32> to vector<16x128xbf16>
    %c0_87 = arith.constant 0 : index
    %c96 = arith.constant 96 : index
    %c0_88 = arith.constant 0 : index
    %173 = vector.load %arg5[%c0_87, %c96, %c0_88] : memref<1x128x128xbf16, #tpu.memory_space<vmem>>, vector<1x16x128xbf16>
    %174 = vector.shape_cast %173 : vector<1x16x128xbf16> to vector<16x128xbf16>
    %175 = vector.shape_cast %172 : vector<16x128xbf16> to vector<1x16x128xbf16>
    tpu.vector_store %arg5[%c0_87, %c96, %c0_88], %175 {strides = array<i32>} : memref<1x128x128xbf16, #tpu.memory_space<vmem>>, vector<1x16x128xbf16>,
    %c7 = arith.constant 7 : index
    %c0_89 = arith.constant 0 : index
    %176 = memref.load %arg2[%c7, %c0_89] : memref<8x4xf32, #tpu.memory_space<smem>>
    %177 = vector.broadcast %176 : f32 to vector<16x128xf32>
    %178 = arith.mulf %1, %177 : vector<16x128xf32>
    %c7_90 = arith.constant 7 : index
    %c1_91 = arith.constant 1 : index
    %179 = memref.load %arg2[%c7_90, %c1_91] : memref<8x4xf32, #tpu.memory_space<smem>>
    %180 = vector.broadcast %179 : f32 to vector<16x128xf32>
    %181 = arith.mulf %3, %180 : vector<16x128xf32>
    %182 = arith.addf %178, %181 : vector<16x128xf32>
    %c7_92 = arith.constant 7 : index
    %c2_93 = arith.constant 2 : index
    %183 = memref.load %arg2[%c7_92, %c2_93] : memref<8x4xf32, #tpu.memory_space<smem>>
    %184 = vector.broadcast %183 : f32 to vector<16x128xf32>
    %185 = arith.mulf %5, %184 : vector<16x128xf32>
    %186 = arith.addf %182, %185 : vector<16x128xf32>
    %c7_94 = arith.constant 7 : index
    %c3_95 = arith.constant 3 : index
    %187 = memref.load %arg2[%c7_94, %c3_95] : memref<8x4xf32, #tpu.memory_space<smem>>
    %188 = vector.broadcast %187 : f32 to vector<16x128xf32>
    %189 = arith.mulf %7, %188 : vector<16x128xf32>
    %190 = arith.addf %186, %189 : vector<16x128xf32>
    %c7_96 = arith.constant 7 : index
    %191 = memref.load %arg3[%c7_96] : memref<8xf32, #tpu.memory_space<smem>>
    %192 = vector.broadcast %191 : f32 to vector<16x128xf32>
    %193 = arith.addf %190, %192 : vector<16x128xf32>
    %cst_97 = arith.constant 0.000000e+00 : f32
    %194 = vector.broadcast %cst_97 : f32 to vector<16x128xf32>
    %195 = arith.maximumf %193, %194 : vector<16x128xf32>
    %196 = arith.truncf %195 : vector<16x128xf32> to vector<16x128xbf16>
    %c0_98 = arith.constant 0 : index
    %c112 = arith.constant 112 : index
    %c0_99 = arith.constant 0 : index
    %197 = vector.load %arg5[%c0_98, %c112, %c0_99] : memref<1x128x128xbf16, #tpu.memory_space<vmem>>, vector<1x16x128xbf16>
    %198 = vector.shape_cast %197 : vector<1x16x128xbf16> to vector<16x128xbf16>
    %199 = vector.shape_cast %196 : vector<16x128xbf16> to vector<1x16x128xbf16>
    tpu.vector_store %arg5[%c0_98, %c112, %c0_99], %199 {strides = array<i32>} : memref<1x128x128xbf16, #tpu.memory_space<vmem>>, vector<1x16x128xbf16>,
    return
  }
  func.func @transform_0(%arg0: i32, %arg1: i32) -> (i32, i32) {
    %c0_i32 = arith.constant 0 : i32
    %c0_i32_0 = arith.constant 0 : i32
    %c0_i32_1 = arith.constant 0 : i32
    return %c0_i32, %c0_i32_0 : i32, i32
  }
  func.func @transform_1(%arg0: i32, %arg1: i32) -> i32 {
    %c0_i32 = arith.constant 0 : i32
    %c0_i32_0 = arith.constant 0 : i32
    return %c0_i32 : i32
  }
  func.func @transform_2(%arg0: i32, %arg1: i32) -> (i32, i32, i32) {
    %c0_i32 = arith.constant 0 : i32
    %c0_i32_0 = arith.constant 0 : i32
    return %arg0, %c0_i32, %arg1 : i32, i32, i32
  }
  func.func @transform_3(%arg0: i32, %arg1: i32) -> (i32, i32, i32) {
    %c0_i32 = arith.constant 0 : i32
    %c0_i32_0 = arith.constant 0 : i32
    return %arg0, %c0_i32, %arg1 : i32, i32, i32
  }
}

</mosaic_0001>

<llo_original>
// kernel: tpu_custom_call.1
$region0: #{tpu_custom_call.1}
  #allocation0 [shape = 'u32[]', space=smem, size = 0x4, offset = 0x4, fixed_abs, tag = 'smem constant byte address 0x4 - core index']
  #allocation1 [shape = 'u32[72,128]{1,0:T(1,128)}', space=vmem, size = 0x9000, scoped, tag = 'internal scratch']
  %s0 = inlined_call_operand.vmem [shape: f32[8,4], index: 0, kind: input, shape index: {}]
  %s1 = inlined_call_operand.vmem [shape: f32[8], index: 1, kind: input, shape index: {}]
  %s2 = inlined_call_operand.hbm [shape: f32[2,64,128], index: 2, kind: input, shape index: {}]
  %s3 = inlined_call_operand.hbm [shape: bf16[2,128,128], index: 3, kind: output, shape index: {}]
  %s4 = sld [smem:[#allocation0]]
  $region57: #{tpu_custom_call.1} parent=0
    _
  %s6 = ssub.s32 1, %s4
  %s7 = scalar_select 0, %s6, %s4
  $region1: #{tpu_custom_call.1} parent=0
    #allocation2 [shape = 'u8[4096]{0}', space=smem, size = 0x1000, scoped, tag = 'input window, operand 0, single buffered']
    #allocation3 [shape = 's32[2]{0}', space=sflag, size = 0x8, scoped, tag = 'scoped memory for tpu_custom_call.1']
    #allocation4 [shape = 's32[2]{0}', space=sflag, size = 0x8, scoped, tag = 'scoped memory for tpu_custom_call.1']
    #allocation5 [shape = 's32[2]{0}', space=sflag, size = 0x8, scoped, tag = 'scoped memory for tpu_custom_call.1']
    #allocation6 [shape = 'u8[512]{0}', space=smem, size = 0x200, scoped, tag = 'input window, operand 1, single buffered']
    #allocation7 [shape = 's32[1]{0}', space=sflag, size = 0x4, scoped, tag = 'scoped memory for tpu_custom_call.1']
    #allocation8 [shape = 'u8[65536]{0}', space=vmem, size = 0x10000, scoped, tag = 'input window, operand 2']
    #allocation9 [shape = 'u8[65536]{0}', space=vmem, size = 0x10000, scoped, tag = 'output window, operand 0']
    %8 = vsyncpa [#allocation5], 0
    %9 = vsyncpa [#allocation7], 0
    %10 = vsyncpa [#allocation3], 0
    %s11 = scalar_lea.sflag [#allocation3], 1
    %12 = vsyncpa %s11, 0
    %13 = vsyncpa [#allocation4], 0
    %s14 = scalar_lea.sflag [#allocation4], 1
    %15 = vsyncpa %s14, 0
    loop: start=0, step=1, limit=4
    $region2: #{tpu_custom_call.1} parent=1 // loop_pre_header
      _
    $region3: #{tpu_custom_call.1} parent=1 // loop_header
      %s17 = sphi 0, %s21
      %p18 = scmp.ge.s32.totalorder %s17, 4
      %s24 = sphi 0, %s36
      %s25 = sphi 0, %s32
      %s26 = sphi 0, %s24
      %s27 = sphi 0, %s25
      %s28 = sphi 0, %s26
      %s29 = sphi 0, %s27
      %s37 = sphi 0, %s37
      %s39 = sphi 0, %s37
      %s40 = sphi 0, %s39
      %s54 = sphi 0, %s40
      %s58 = sphi 0, %s58
      %s60 = sphi 0, %s58
      %s61 = sphi 0, %s60
      %s75 = sphi 0, %s61
      %s83 = sphi 0, %s85
      %s86 = sphi 0, %s83
      %s87 = sphi 0, %s86
      %s103 = sphi 0, %s87
      %s111 = sphi 0, %s113
      %s114 = sphi 0, %s111
      %s115 = sphi 0, %s114
      %s131 = sphi 0, %s115
    $region4: #{tpu_custom_call.1} parent=1 // loop_header_branch
      %20 = sbr.rel (%p18) target = $region8
    $region5: #{tpu_custom_call.1} parent=1 // loop_body
      %s22 = ssub.s32 %s17, 1
      %s23 = ssub.s32 %s17, 2
      %s30 = sadd.s32 1, %s25
      %p31 = scmp.ge.s32.totalorder %s30, 1
      %s32 = scalar_select %p31, 0, %s30
      %s33 = sadd.s32 1, %s24
      %s34 = scalar_select %p31, %s33, %s24
      %p35 = scmp.ge.s32.totalorder %s34, 2
      %s36 = scalar_select %p35, 0, %s34
      %s38 = sadd.s32 %s37, 1
      %p41 = scmp.eq.s32.totalorder %s17, 1
      %p42 = scmp.ne.s32.totalorder %s37, %s39
      %p43 = scmp.eq.s32.totalorder %s17, 0
      %p44 = por %p42, %p43
      %p45 = scmp.ne.s32.totalorder %s37, %s39
      %p46 = scmp.eq.s32.totalorder %s22, 1
      %p47 = por %p45, %p46
      %p48 = scmp.ne.s32.totalorder %s39, %s40
      %p49 = scmp.eq.s32.totalorder %s22, 0
      %p50 = por %p48, %p49
      %p51 = scmp.ne.s32.totalorder %s39, %s40
      %p52 = scmp.eq.s32.totalorder %s23, 1
      %p53 = por %p51, %p52
      %p55 = scmp.ne.s32.totalorder %s40, %s54
      %p56 = scmp.eq.s32.totalorder %s23, 0
      %p57 = por %p55, %p56
      %s59 = sadd.s32 %s58, 1
      %p62 = scmp.eq.s32.totalorder %s17, 1
      %p63 = scmp.ne.s32.totalorder %s58, %s60
      %p64 = scmp.eq.s32.totalorder %s17, 0
      %p65 = por %p63, %p64
      %p66 = scmp.ne.s32.totalorder %s58, %s60
      %p67 = scmp.eq.s32.totalorder %s22, 1
      %p68 = por %p66, %p67
      %p69 = scmp.ne.s32.totalorder %s60, %s61
      %p70 = scmp.eq.s32.totalorder %s22, 0
      %p71 = por %p69, %p70
      %p72 = scmp.ne.s32.totalorder %s60, %s61
      %p73 = scmp.eq.s32.totalorder %s23, 1
      %p74 = por %p72, %p73
      %p76 = scmp.ne.s32.totalorder %s61, %s75
      %p77 = scmp.eq.s32.totalorder %s23, 0
      %p78 = por %p76, %p77
      %s79 = ssub.s32 %s24, %s36
      %s80 = ssub.s32 %s25, %s32
      %s81 = sor.u32 %s79, %s80
      %p82 = scmp.eq.s32.totalorder %s81, 0
      %s84 = sadd.s32 %s83, 1
      %s85 = scalar_select %p82, %s83, %s84
      %p88 = pneg %p82
      %p89 = scmp.eq.s32.totalorder %s17, 1
      %p90 = por %p88, %p89
      %p91 = scmp.ne.s32.totalorder %s83, %s86
      %p92 = scmp.eq.s32.totalorder %s17, 0
      %p93 = por %p91, %p92
      %p94 = scmp.ne.s32.totalorder %s83, %s86
      %p95 = scmp.eq.s32.totalorder %s22, 1
      %p96 = por %p94, %p95
      %p97 = scmp.ne.s32.totalorder %s86, %s87
      %p98 = scmp.eq.s32.totalorder %s22, 0
      %p99 = por %p97, %p98
      %p100 = scmp.ne.s32.totalorder %s86, %s87
      %p101 = scmp.eq.s32.totalorder %s23, 1
      %p102 = por %p100, %p101
      %p104 = scmp.ne.s32.totalorder %s87, %s103
      %p105 = scmp.eq.s32.totalorder %s23, 0
      %p106 = por %p104, %p105
      %s107 = ssub.s32 %s24, %s36
      %s108 = ssub.s32 %s25, %s32
      %s109 = sor.u32 %s107, %s108
      %p110 = scmp.eq.s32.totalorder %s109, 0
      %s112 = sadd.s32 %s111, 1
      %s113 = scalar_select %p110, %s111, %s112
      %p116 = pneg %p110
      %p117 = scmp.eq.s32.totalorder %s17, 1
      %p118 = por %p116, %p117
      %p119 = scmp.ne.s32.totalorder %s111, %s114
      %p120 = scmp.eq.s32.totalorder %s17, 0
      %p121 = por %p119, %p120
      %p122 = scmp.ne.s32.totalorder %s111, %s114
      %p123 = scmp.eq.s32.totalorder %s22, 1
      %p124 = por %p122, %p123
      %p125 = scmp.ne.s32.totalorder %s114, %s115
      %p126 = scmp.eq.s32.totalorder %s22, 0
      %p127 = por %p125, %p126
      %p128 = scmp.ne.s32.totalorder %s114, %s115
      %p129 = scmp.eq.s32.totalorder %s23, 1
      %p130 = por %p128, %p129
      %p132 = scmp.ne.s32.totalorder %s115, %s131
      %p133 = scmp.eq.s32.totalorder %s23, 0
      %p134 = por %p132, %p133
      %p135 = scmp.le.s32.totalorder 1, %s17
      %p136 = scmp.lt.s32.totalorder %s17, 3
      %p137 = pnand %p135, %p136
      %p138 = pneg %p137
      // Predicated region
      $region9: #{tpu_custom_call.1} parent=5 // pred_check
        _
      $region10: #{tpu_custom_call.1} parent=5 // pred_check_branch
        %140 = sbr.rel (%p137) target = $region12
      $region11: #{tpu_custom_call.1} parent=5 // pred_region
        %s141 = ssub.s32 %s17, 1
        // Predicated region
        $region13: #{tpu_custom_call.1} parent=11 // pred_check
          %p142 = pneg %p50
        $region14: #{tpu_custom_call.1} parent=11 // pred_check_branch
          %144 = sbr.rel (%p142) target = $region16
        $region15: #{tpu_custom_call.1} parent=11 // pred_region
          %146 = vsyncadd [#allocation5], 0
          %s148 = sshll.u32 %s0, 4
          %s149 = int_to_ptr.vmem [resolvable:$true] %s148
          %151 = dma.vmem_to_smem %s149, 128, [#allocation2], [#allocation5]
        $region16: #{tpu_custom_call.1} parent=11 // pred_fallthru
          _
        // Predicated region
        $region17: #{tpu_custom_call.1} parent=11 // pred_check
          %p152 = pneg %p71
        $region18: #{tpu_custom_call.1} parent=11 // pred_check_branch
          %154 = sbr.rel (%p152) target = $region20
        $region19: #{tpu_custom_call.1} parent=11 // pred_region
          %156 = vsyncadd [#allocation7], 0
          %s158 = sshll.u32 %s1, 4
          %s159 = int_to_ptr.vmem [resolvable:$true] %s158
          %161 = dma.vmem_to_smem %s159, 16, [#allocation6], [#allocation7]
        $region20: #{tpu_custom_call.1} parent=11 // pred_fallthru
          _
      $region12: #{tpu_custom_call.1} parent=5 // pred_fallthru
        _
      %p162 = scmp.lt.s32.totalorder %s17, 2
      // Predicated region
      $region21: #{tpu_custom_call.1} parent=5 // pred_check
        %p163 = pneg %p162
      $region22: #{tpu_custom_call.1} parent=5 // pred_check_branch
        %165 = sbr.rel (%p163) target = $region24
      $region23: #{tpu_custom_call.1} parent=5 // pred_region
        // Predicated region
        $region25: #{tpu_custom_call.1} parent=23 // pred_check
          %p166 = pneg %p93
        $region26: #{tpu_custom_call.1} parent=23 // pred_check_branch
          %168 = sbr.rel (%p166) target = $region28
        $region27: #{tpu_custom_call.1} parent=23 // pred_region
          %s169 = sand.u32 %s83, 1
          %s170 = scalar_lea.sflag [#allocation3], %s169
          %s171 = sand.u32 %s83, 1
          %s172 = smul.addr %s171, 64
          %s173 = scalar_lea.vmem [#allocation8], %s172
          %175 = vsyncadd %s170, 0
          %s176 = smul.addr %s24, 8
          %s177 = sadd.s32 %s25, %s176
          %s178 = smul.addr %s177, 8
          %s179 = scalar_lea.hbm %s2, %s178
          %s180 = sshll.u32 %s179, 4
          %s181 = int_to_ptr.hbm [resolvable:$true] %s180
          %s182 = sshll.u32 %s173, 4
          %s183 = int_to_ptr.vmem [resolvable:$true] %s182
          %188 = dma.hbm_to_vmem [thread:$0]  %s181, 1024, %s183, %s170, 128, 128, 8
        $region28: #{tpu_custom_call.1} parent=23 // pred_fallthru
          _
      $region24: #{tpu_custom_call.1} parent=5 // pred_fallthru
        _
      %p189 = scmp.le.s32.totalorder 1, %s17
      %p190 = scmp.lt.s32.totalorder %s17, 3
      %p191 = pnand %p189, %p190
      %p192 = pneg %p191
      // Predicated region
      $region29: #{tpu_custom_call.1} parent=5 // pred_check
        _
      $region30: #{tpu_custom_call.1} parent=5 // pred_check_branch
        %194 = sbr.rel (%p191) target = $region32
      $region31: #{tpu_custom_call.1} parent=5 // pred_region
        %s195 = ssub.s32 %s17, 1
        // Predicated region
        $region33: #{tpu_custom_call.1} parent=31 // pred_check
          %p196 = pneg %p50
        $region34: #{tpu_custom_call.1} parent=31 // pred_check_branch
          %198 = sbr.rel (%p196) target = $region36
        $region35: #{tpu_custom_call.1} parent=31 // pred_region
          %200 = dma.done [#allocation5], 128
        $region36: #{tpu_custom_call.1} parent=31 // pred_fallthru
          _
        // Predicated region
        $region37: #{tpu_custom_call.1} parent=31 // pred_check
          %p201 = pneg %p71
        $region38: #{tpu_custom_call.1} parent=31 // pred_check_branch
          %203 = sbr.rel (%p201) target = $region40
        $region39: #{tpu_custom_call.1} parent=31 // pred_region
          %205 = dma.done [#allocation7], 16
        $region40: #{tpu_custom_call.1} parent=31 // pred_fallthru
          _
        %s206 = sand.u32 %s86, 1
        %s207 = scalar_lea.sflag [#allocation3], %s206
        %s208 = sand.u32 %s86, 1
        %s209 = smul.addr %s208, 64
        %s210 = scalar_lea.vmem [#allocation8], %s209
        // Predicated region
        $region41: #{tpu_custom_call.1} parent=31 // pred_check
          %p211 = pneg %p99
        $region42: #{tpu_custom_call.1} parent=31 // pred_check_branch
          %213 = sbr.rel (%p211) target = $region44
        $region43: #{tpu_custom_call.1} parent=31 // pred_region
          %215 = dma.done %s207, 1024
        $region44: #{tpu_custom_call.1} parent=31 // pred_fallthru
          _
        %216 = sfence
        %p217 = pneg %p50
        %p218 = pneg %p47
        %p219 = pneg %p71
        %p220 = pneg %p68
        %s221 = sand.u32 %s86, 1
        %s222 = scalar_lea.sflag [#allocation3], %s221
        %s223 = sand.u32 %s86, 1
        %s224 = smul.addr %s223, 64
        %s225 = scalar_lea.vmem [#allocation8], %s224
        %p226 = pneg %p99
        %p227 = pneg %p96
        %p228 = pneg %p127
        %p229 = pneg %p124
        %s230 = sand.u32 %s114, 1
        %s231 = scalar_lea.sflag [#allocation4], %s230
        %s232 = sand.u32 %s114, 1
        %s233 = smul.addr %s232, 64
        %s234 = scalar_lea.vmem [#allocation9], %s233
        %v235 = vld [vmem:[%s210] sm:$0xff]
        %v236 = vld [vmem:[%s210 + $0x8] sm:$0xff]
        %v237 = vld [vmem:[%s210 + $0x10] sm:$0xff]
        %v238 = vld [vmem:[%s210 + $0x18] sm:$0xff]
        %v239 = vld [vmem:[%s210 + $0x20] sm:$0xff]
        %v240 = vld [vmem:[%s210 + $0x28] sm:$0xff]
        %v241 = vld [vmem:[%s210 + $0x30] sm:$0xff]
        %v242 = vld [vmem:[%s210 + $0x38] sm:$0xff]
        %s243 = sld [smem:[#allocation2]]
        %v244 = vstv %s243
        %v245 = vmul.f32 %v235, %v244
        %v246 = vmul.f32 %v236, %v244
        %s247 = sld [smem:[#allocation2 + $0x1]]
        %v248 = vstv %s247
        %v249 = vmul.f32 %v237, %v248
        %v250 = vmul.f32 %v238, %v248
        %v251 = vadd.f32 %v245, %v249
        %v252 = vadd.f32 %v246, %v250
        %s253 = sld [smem:[#allocation2 + $0x2]]
        %v254 = vstv %s253
        %v255 = vmul.f32 %v239, %v254
        %v256 = vmul.f32 %v240, %v254
        %v257 = vadd.f32 %v251, %v255
        %v258 = vadd.f32 %v252, %v256
        %s259 = sld [smem:[#allocation2 + $0x3]]
        %v260 = vstv %s259
        %v261 = vmul.f32 %v241, %v260
        %v262 = vmul.f32 %v242, %v260
        %v263 = vadd.f32 %v257, %v261
        %v264 = vadd.f32 %v258, %v262
        %s265 = sld [smem:[#allocation6]]
        %v266 = vstv %s265
        %v267 = vadd.f32 %v263, %v266
        %v268 = vadd.f32 %v264, %v266
        %v269 = vmax.f32 %v267, 0.0
        %v270 = vmax.f32 %v268, 0.0
        %v271 = vpack.c.bf16 %v269, %v269
        %v272 = vpack.c.bf16 %v270, %v270
        %273 = vst [vmem:[%s234] sm:$0xf] %v271
        %274 = vst [vmem:[%s234 + $0x4] sm:$0xf] %v272
        %s275 = sld [smem:[#allocation2 + $0x80]]
        %v276 = vstv %s275
        %v277 = vmul.f32 %v235, %v276
        %v278 = vmul.f32 %v236, %v276
        %s279 = sld [smem:[#allocation2 + $0x81]]
        %v280 = vstv %s279
        %v281 = vmul.f32 %v237, %v280
        %v282 = vmul.f32 %v238, %v280
        %v283 = vadd.f32 %v277, %v281
        %v284 = vadd.f32 %v278, %v282
        %s285 = sld [smem:[#allocation2 + $0x82]]
        %v286 = vstv %s285
        %v287 = vmul.f32 %v239, %v286
        %v288 = vmul.f32 %v240, %v286
        %v289 = vadd.f32 %v283, %v287
        %v290 = vadd.f32 %v284, %v288
        %s291 = sld [smem:[#allocation2 + $0x83]]
        %v292 = vstv %s291
        %v293 = vmul.f32 %v241, %v292
        %v294 = vmul.f32 %v242, %v292
        %v295 = vadd.f32 %v289, %v293
        %v296 = vadd.f32 %v290, %v294
        %s297 = sld [smem:[#allocation6 + $0x1]]
        %v298 = vstv %s297
        %v299 = vadd.f32 %v295, %v298
        %v300 = vadd.f32 %v296, %v298
        %v301 = vmax.f32 %v299, 0.0
        %v302 = vmax.f32 %v300, 0.0
        %v303 = vpack.c.bf16 %v301, %v301
        %v304 = vpack.c.bf16 %v302, %v302
        %305 = vst [vmem:[%s234 + $0x8] sm:$0xf] %v303
        %306 = vst [vmem:[%s234 + $0xc] sm:$0xf] %v304
        %s307 = sld [smem:[#allocation2 + $0x100]]
        %v308 = vstv %s307
        %v309 = vmul.f32 %v235, %v308
        %v310 = vmul.f32 %v236, %v308
        %s311 = sld [smem:[#allocation2 + $0x101]]
        %v312 = vstv %s311
        %v313 = vmul.f32 %v237, %v312
        %v314 = vmul.f32 %v238, %v312
        %v315 = vadd.f32 %v309, %v313
        %v316 = vadd.f32 %v310, %v314
        %s317 = sld [smem:[#allocation2 + $0x102]]
        %v318 = vstv %s317
        %v319 = vmul.f32 %v239, %v318
        %v320 = vmul.f32 %v240, %v318
        %v321 = vadd.f32 %v315, %v319
        %v322 = vadd.f32 %v316, %v320
        %s323 = sld [smem:[#allocation2 + $0x103]]
        %v324 = vstv %s323
        %v325 = vmul.f32 %v241, %v324
        %v326 = vmul.f32 %v242, %v324
        %v327 = vadd.f32 %v321, %v325
        %v328 = vadd.f32 %v322, %v326
        %s329 = sld [smem:[#allocation6 + $0x2]]
        %v330 = vstv %s329
        %v331 = vadd.f32 %v327, %v330
        %v332 = vadd.f32 %v328, %v330
        %v333 = vmax.f32 %v331, 0.0
        %v334 = vmax.f32 %v332, 0.0
        %v335 = vpack.c.bf16 %v333, %v333
        %v336 = vpack.c.bf16 %v334, %v334
        %337 = vst [vmem:[%s234 + $0x10] sm:$0xf] %v335
        %338 = vst [vmem:[%s234 + $0x14] sm:$0xf] %v336
        %s339 = sld [smem:[#allocation2 + $0x180]]
        %v340 = vstv %s339
        %v341 = vmul.f32 %v235, %v340
        %v342 = vmul.f32 %v236, %v340
        %s343 = sld [smem:[#allocation2 + $0x181]]
        %v344 = vstv %s343
        %v345 = vmul.f32 %v237, %v344
        %v346 = vmul.f32 %v238, %v344
        %v347 = vadd.f32 %v341, %v345
        %v348 = vadd.f32 %v342, %v346
        %s349 = sld [smem:[#allocation2 + $0x182]]
        %v350 = vstv %s349
        %v351 = vmul.f32 %v239, %v350
        %v352 = vmul.f32 %v240, %v350
        %v353 = vadd.f32 %v347, %v351
        %v354 = vadd.f32 %v348, %v352
        %s355 = sld [smem:[#allocation2 + $0x183]]
        %v356 = vstv %s355
        %v357 = vmul.f32 %v241, %v356
        %v358 = vmul.f32 %v242, %v356
        %v359 = vadd.f32 %v353, %v357
        %v360 = vadd.f32 %v354, %v358
        %s361 = sld [smem:[#allocation6 + $0x3]]
        %v362 = vstv %s361
        %v363 = vadd.f32 %v359, %v362
        %v364 = vadd.f32 %v360, %v362
        %v365 = vmax.f32 %v363, 0.0
        %v366 = vmax.f32 %v364, 0.0
        %v367 = vpack.c.bf16 %v365, %v365
        %v368 = vpack.c.bf16 %v366, %v366
        %369 = vst [vmem:[%s234 + $0x18] sm:$0xf] %v367
        %370 = vst [vmem:[%s234 + $0x1c] sm:$0xf] %v368
        %s371 = sld [smem:[#allocation2 + $0x200]]
        %v372 = vstv %s371
        %v373 = vmul.f32 %v235, %v372
        %v374 = vmul.f32 %v236, %v372
        %s375 = sld [smem:[#allocation2 + $0x201]]
        %v376 = vstv %s375
        %v377 = vmul.f32 %v237, %v376
        %v378 = vmul.f32 %v238, %v376
        %v379 = vadd.f32 %v373, %v377
        %v380 = vadd.f32 %v374, %v378
        %s381 = sld [smem:[#allocation2 + $0x202]]
        %v382 = vstv %s381
        %v383 = vmul.f32 %v239, %v382
        %v384 = vmul.f32 %v240, %v382
        %v385 = vadd.f32 %v379, %v383
        %v386 = vadd.f32 %v380, %v384
        %s387 = sld [smem:[#allocation2 + $0x203]]
        %v388 = vstv %s387
        %v389 = vmul.f32 %v241, %v388
        %v390 = vmul.f32 %v242, %v388
        %v391 = vadd.f32 %v385, %v389
        %v392 = vadd.f32 %v386, %v390
        %s393 = sld [smem:[#allocation6 + $0x4]]
        %v394 = vstv %s393
        %v395 = vadd.f32 %v391, %v394
        %v396 = vadd.f32 %v392, %v394
        %v397 = vmax.f32 %v395, 0.0
        %v398 = vmax.f32 %v396, 0.0
        %v399 = vpack.c.bf16 %v397, %v397
        %v400 = vpack.c.bf16 %v398, %v398
        %401 = vst [vmem:[%s234 + $0x20] sm:$0xf] %v399
        %402 = vst [vmem:[%s234 + $0x24] sm:$0xf] %v400
        %s403 = sld [smem:[#allocation2 + $0x280]]
        %v404 = vstv %s403
        %v405 = vmul.f32 %v235, %v404
        %v406 = vmul.f32 %v236, %v404
        %s407 = sld [smem:[#allocation2 + $0x281]]
        %v408 = vstv %s407
        %v409 = vmul.f32 %v237, %v408
        %v410 = vmul.f32 %v238, %v408
        %v411 = vadd.f32 %v405, %v409
        %v412 = vadd.f32 %v406, %v410
        %s413 = sld [smem:[#allocation2 + $0x282]]
        %v414 = vstv %s413
        %v415 = vmul.f32 %v239, %v414
        %v416 = vmul.f32 %v240, %v414
        %v417 = vadd.f32 %v411, %v415
        %v418 = vadd.f32 %v412, %v416
        %s419 = sld [smem:[#allocation2 + $0x283]]
        %v420 = vstv %s419
        %v421 = vmul.f32 %v241, %v420
        %v422 = vmul.f32 %v242, %v420
        %v423 = vadd.f32 %v417, %v421
        %v424 = vadd.f32 %v418, %v422
        %s425 = sld [smem:[#allocation6 + $0x5]]
        %v426 = vstv %s425
        %v427 = vadd.f32 %v423, %v426
        %v428 = vadd.f32 %v424, %v426
        %v429 = vmax.f32 %v427, 0.0
        %v430 = vmax.f32 %v428, 0.0
        %v431 = vpack.c.bf16 %v429, %v429
        %v432 = vpack.c.bf16 %v430, %v430
        %433 = vst [vmem:[%s234 + $0x28] sm:$0xf] %v431
        %434 = vst [vmem:[%s234 + $0x2c] sm:$0xf] %v432
        %s435 = sld [smem:[#allocation2 + $0x300]]
        %v436 = vstv %s435
        %v437 = vmul.f32 %v235, %v436
        %v438 = vmul.f32 %v236, %v436
        %s439 = sld [smem:[#allocation2 + $0x301]]
        %v440 = vstv %s439
        %v441 = vmul.f32 %v237, %v440
        %v442 = vmul.f32 %v238, %v440
        %v443 = vadd.f32 %v437, %v441
        %v444 = vadd.f32 %v438, %v442
        %s445 = sld [smem:[#allocation2 + $0x302]]
        %v446 = vstv %s445
        %v447 = vmul.f32 %v239, %v446
        %v448 = vmul.f32 %v240, %v446
        %v449 = vadd.f32 %v443, %v447
        %v450 = vadd.f32 %v444, %v448
        %s451 = sld [smem:[#allocation2 + $0x303]]
        %v452 = vstv %s451
        %v453 = vmul.f32 %v241, %v452
        %v454 = vmul.f32 %v242, %v452
        %v455 = vadd.f32 %v449, %v453
        %v456 = vadd.f32 %v450, %v454
        %s457 = sld [smem:[#allocation6 + $0x6]]
        %v458 = vstv %s457
        %v459 = vadd.f32 %v455, %v458
        %v460 = vadd.f32 %v456, %v458
        %v461 = vmax.f32 %v459, 0.0
        %v462 = vmax.f32 %v460, 0.0
        %v463 = vpack.c.bf16 %v461, %v461
        %v464 = vpack.c.bf16 %v462, %v462
        %465 = vst [vmem:[%s234 + $0x30] sm:$0xf] %v463
        %466 = vst [vmem:[%s234 + $0x34] sm:$0xf] %v464
        %s467 = sld [smem:[#allocation2 + $0x380]]
        %v468 = vstv %s467
        %v469 = vmul.f32 %v235, %v468
        %v470 = vmul.f32 %v236, %v468
        %s471 = sld [smem:[#allocation2 + $0x381]]
        %v472 = vstv %s471
        %v473 = vmul.f32 %v237, %v472
        %v474 = vmul.f32 %v238, %v472
        %v475 = vadd.f32 %v469, %v473
        %v476 = vadd.f32 %v470, %v474
        %s477 = sld [smem:[#allocation2 + $0x382]]
        %v478 = vstv %s477
        %v479 = vmul.f32 %v239, %v478
        %v480 = vmul.f32 %v240, %v478
        %v481 = vadd.f32 %v475, %v479
        %v482 = vadd.f32 %v476, %v480
        %s483 = sld [smem:[#allocation2 + $0x383]]
        %v484 = vstv %s483
        %v485 = vmul.f32 %v241, %v484
        %v486 = vmul.f32 %v242, %v484
        %v487 = vadd.f32 %v481, %v485
        %v488 = vadd.f32 %v482, %v486
        %s489 = sld [smem:[#allocation6 + $0x7]]
        %v490 = vstv %s489
        %v491 = vadd.f32 %v487, %v490
        %v492 = vadd.f32 %v488, %v490
        %v493 = vmax.f32 %v491, 0.0
        %v494 = vmax.f32 %v492, 0.0
        %v495 = vpack.c.bf16 %v493, %v493
        %v496 = vpack.c.bf16 %v494, %v494
        %497 = vst [vmem:[%s234 + $0x38] sm:$0xf] %v495
        %498 = vst [vmem:[%s234 + $0x3c] sm:$0xf] %v496
        %s499 = sand.u32 %s114, 1
        %s500 = scalar_lea.sflag [#allocation4], %s499
        %s501 = sand.u32 %s114, 1
        %s502 = smul.addr %s501, 64
        %s503 = scalar_lea.vmem [#allocation9], %s502
        // Predicated region
        $region45: #{tpu_custom_call.1} parent=31 // pred_check
          %p504 = pneg %p124
        $region46: #{tpu_custom_call.1} parent=31 // pred_check_branch
          %506 = sbr.rel (%p504) target = $region48
        $region47: #{tpu_custom_call.1} parent=31 // pred_region
          %508 = vsyncadd %s500, 0
          %s509 = smul.addr %s26, 16
          %s510 = sadd.s32 %s27, %s509
          %s511 = smul.addr %s510, 4
          %s512 = scalar_lea.hbm %s3, %s511
          %s513 = sshll.u32 %s503, 4
          %s514 = int_to_ptr.vmem [resolvable:$true] %s513
          %s515 = sshll.u32 %s512, 4
          %s516 = int_to_ptr.hbm [resolvable:$true] %s515
          %521 = dma.vmem_to_hbm [thread:$0]  %s514, 1024, %s516, %s500, 64, 64, 4
        $region48: #{tpu_custom_call.1} parent=31 // pred_fallthru
          _
      $region32: #{tpu_custom_call.1} parent=5 // pred_fallthru
        _
      %p522 = scmp.le.s32.totalorder 2, %s17
      // Predicated region
      $region49: #{tpu_custom_call.1} parent=5 // pred_check
        %p523 = pneg %p522
      $region50: #{tpu_custom_call.1} parent=5 // pred_check_branch
        %525 = sbr.rel (%p523) target = $region52
      $region51: #{tpu_custom_call.1} parent=5 // pred_region
        %s526 = ssub.s32 %s17, 2
        // Predicated region
        $region53: #{tpu_custom_call.1} parent=51 // pred_check
          %p527 = pneg %p130
        $region54: #{tpu_custom_call.1} parent=51 // pred_check_branch
          %529 = sbr.rel (%p527) target = $region56
        $region55: #{tpu_custom_call.1} parent=51 // pred_region
          %s530 = sand.u32 %s115, 1
          %s531 = scalar_lea.sflag [#allocation4], %s530
          %s532 = sand.u32 %s115, 1
          %s533 = smul.addr %s532, 64
          %s534 = scalar_lea.vmem [#allocation9], %s533
          %536 = dma.done %s531, 1024
        $region56: #{tpu_custom_call.1} parent=51 // pred_fallthru
          _
      $region52: #{tpu_custom_call.1} parent=5 // pred_fallthru
        _
    $region6: #{tpu_custom_call.1} parent=1 // loop_footer
      %s21 = sadd.s32 1, %s17
    $region7: #{tpu_custom_call.1} parent=1 // loop_footer_branch
      %16 = sbr.rel target = $region3
    $region8: #{tpu_custom_call.1} parent=1 // loop_exit
      _
    %537 = vsyncpa [#allocation3], 1
    %s538 = scalar_lea.sflag [#allocation3], 1
    %539 = vsyncpa %s538, 1
    %540 = vsyncpa [#allocation4], 1
    %s541 = scalar_lea.sflag [#allocation4], 1
    %542 = vsyncpa %s541, 1
    %543 = vsyncpa [#allocation5], 1
    %s544 = scalar_lea.sflag [#allocation5], 1
    %545 = vsyncpa %s544, 1
    %546 = vsyncpa [#allocation7], 1

</llo_original>
